<compile_context>
chip_gen: v6e
topology: v6e:2x2x1
jax: 0.10.0
libtpu: 0.0.40
codegen_flags: <defaults>
</compile_context>

<pallas_src>
import jax
import jax.numpy as jnp
from jax.experimental import pallas as pl
from jax.experimental.pallas import tpu as pltpu


def _hbm_copy_kernel(x_hbm, o_hbm, sem):
    # One HBM -> HBM DMA for the entire tensor. No VMEM staging, the
    # TensorCore only issues the DMA descriptor and waits on the semaphore.
    cp = pltpu.make_async_copy(x_hbm, o_hbm, sem)
    cp.start()
    cp.wait()


def contiguous_pallas(x):
    """torch.Tensor.contiguous() equivalent: materialized identity copy.

    NOTE: the zero-cost equivalent is simply `return x`; the kernel below is
    the minimal-overhead version of an explicit physical copy.
    """
    orig_shape = x.shape
    n = x.size

    if n % 128 == 0:
        # Lane-dense 2-D slab, last dim on the 128-lane axis.
        flat = x.reshape(n // 128, 128)
        pad = 0
    else:
        # Pad up to a multiple of 128 so the slab stays lane-dense, slice off
        # the padding after the call.
        pad = (-n) % 128
        flat = jnp.pad(x.reshape(n), (0, pad)).reshape((n + pad) // 128, 128)

    out = pl.pallas_call(
        _hbm_copy_kernel,
        out_shape=jax.ShapeDtypeStruct(flat.shape, flat.dtype),
        in_specs=[pl.BlockSpec(memory_space=pl.ANY)],   # raw HBM ref, no auto-DMA
        out_specs=pl.BlockSpec(memory_space=pl.ANY),    # raw HBM ref, no auto-DMA
        scratch_shapes=[pltpu.SemaphoreType.DMA],       # DMA completion semaphore
    )(flat)

    if pad:
        out = out.reshape(-1)[:n]
    return out.reshape(orig_shape)


if __name__ == "__main__":
    key = jax.random.PRNGKey(0)
    # Same shape as the PyTorch module's example input: [1, 48, 2, 14, 14]
    x182 = jax.random.normal(key, (1, 48, 2, 14, 14), dtype=jnp.float32)

    x183 = contiguous_pallas(x182)
    jax.block_until_ready(x183)

    # Sanity: identity semantics
    assert x183.shape == x182.shape
    assert x183.dtype == x182.dtype
    assert bool(jnp.all(x183 == x182))

    print("KERNEL_OK")
</pallas_src>

<mosaic_0001>
module attributes {stable_mosaic.version = 11 : i64} {
  func.func @_hbm_copy_kernel(%arg0: memref<147x128xf32, #tpu.memory_space<any>>, %arg1: memref<147x128xf32, #tpu.memory_space<any>>, %arg2: memref<!tpu.dma_semaphore, #tpu.memory_space<semaphore_mem>>) attributes {dimension_semantics = [], scalar_prefetch = 0 : i64, scratch_operands = 1 : i64, tpu.core_type = #tpu.core_type<tc>} {
    tpu.enqueue_dma source(%arg0 : memref<147x128xf32, #tpu.memory_space<any>>) target(%arg1 : memref<147x128xf32, #tpu.memory_space<any>>) target_semaphore(%arg2 : memref<!tpu.dma_semaphore, #tpu.memory_space<semaphore_mem>>)
    tpu.wait_dma2 semaphore(%arg2 : memref<!tpu.dma_semaphore, #tpu.memory_space<semaphore_mem>>) src(%arg0 : memref<147x128xf32, #tpu.memory_space<any>>) dst(%arg1 : memref<147x128xf32, #tpu.memory_space<any>>)
    return
  }
}

</mosaic_0001>

<llo_original>
// kernel: tpu_custom_call.1
$region0: #{tpu_custom_call.1}
  #allocation0 [shape = 'u32[]', space=smem, size = 0x4, offset = 0x4, fixed_abs, tag = 'smem constant byte address 0x4 - core index']
  #allocation1 [shape = 'u32[144,128]{1,0:T(1,128)}', space=vmem, size = 0x12000, scoped, tag = 'internal scratch']
  #allocation2 [shape = 's32[1]{0}', space=sflag, size = 0x4, scoped, tag = 'scratch operand']
  #allocation3 [shape = 's32[]', space=sflag, size = 0x4, offset = 0, fixed_abs, tag = 'sflag constant byte address 0x0 - dummy sync flag']
  #allocation4 [shape = 'u32[0]{0}', space=smem, size = 0, offset = 0, fixed_abs, tag = 'smem constant byte address 0x0 - null']
  %s0 = inlined_call_operand.hbm [shape: f32[147,128], index: 0, kind: input, shape index: {}]
  %s1 = inlined_call_operand.hbm [shape: f32[147,128], index: 1, kind: output, shape index: {}]
  %s2 = sld [smem:[#allocation0]]
  $region2: #{tpu_custom_call.1} parent=0
    _
  %s4 = ssub.s32 1, %s2
  %s5 = scalar_select 0, %s4, %s2
  %s7 = sshll.u32 1, 14
  %s8 = sxor.u32 4294967295, %s7
  %12 = dma.general %s0, 2352, %s1, [#allocation2], 131072, [#allocation4], 0, 0
  %s13 = smul.u32 147, 1
  %s14 = sshll.u32 %s13, 4
  %15 = dma.done [#allocation2], %s14
  %16 = vsyncmov [#allocation2]
  %s17 = vpop.sfrf %16
  %p18 = scmp.eq.s32.totalorder %s17, 0
  %p19 = pneg %p18
  %21 = shalt.err (%p19)

</llo_original>
